<compile_context>
chip_gen: v5e
topology: v5e:2x2
jax: 0.10.0
libtpu: 0.0.40
codegen_flags: <defaults>
</compile_context>

<pallas_src>
import functools

import jax
import jax.numpy as jnp
from jax.experimental import pallas as pl
from jax.experimental.pallas import tpu as pltpu


LANE = 128


def _round_up(n, m):
    return ((n + m - 1) // m) * m


# ----------------------------- Pallas kernels -----------------------------

def _mlp_forward_kernel(x_ref, w1_ref, b1_ref, w2_ref, b2_ref, out_ref):
    """logits = relu(x @ w1 + b1) @ w2 + b2 for one (TB, *) batch tile."""
    h = jnp.dot(x_ref[...], w1_ref[...], preferred_element_type=jnp.float32)
    h = jnp.maximum(h + b1_ref[...], 0.0)
    logits = jnp.dot(h.astype(jnp.bfloat16), w2_ref[...],
                     preferred_element_type=jnp.float32) + b2_ref[...]
    out_ref[...] = logits.astype(out_ref.dtype)


def _mlp_loss_kernel(x_ref, w1_ref, b1_ref, w2_ref, b2_ref, y_ref, loss_ref,
                     *, num_classes, total_batch):
    """Fused forward + mean softmax cross-entropy, accumulated over batch tiles."""
    step = pl.program_id(0)

    @pl.when(step == 0)
    def _():
        loss_ref[...] = jnp.zeros_like(loss_ref)

    # ---- forward (MXU, bf16 operands, f32 accumulate) ----
    h = jnp.dot(x_ref[...], w1_ref[...], preferred_element_type=jnp.float32)
    h = jnp.maximum(h + b1_ref[...], 0.0)
    logits = jnp.dot(h.astype(jnp.bfloat16), w2_ref[...],
                     preferred_element_type=jnp.float32) + b2_ref[...]

    # ---- masked softmax cross-entropy over the padded (128-lane) class axis ----
    tb, c_pad = logits.shape
    class_ids = jax.lax.broadcasted_iota(jnp.int32, (tb, c_pad), 1)
    valid = class_ids < num_classes
    masked = jnp.where(valid, logits, jnp.float32(-1e30))
    m = jnp.max(masked, axis=-1, keepdims=True)
    lse = m + jnp.log(jnp.sum(jnp.exp(masked - m), axis=-1, keepdims=True))
    labels = y_ref[...]                                        # (TB, 1) int32
    tgt = jnp.sum(jnp.where(class_ids == labels, logits, 0.0),
                  axis=-1, keepdims=True)
    per_example = lse - tgt                                    # (TB, 1)

    # Accumulate into the VMEM-resident (1,1) output block (constant index_map
    # -> no per-step HBM writeback; a single scalar store at kernel end).
    loss_ref[...] += jnp.sum(per_example, axis=0, keepdims=True)

    @pl.when(step == pl.num_programs(0) - 1)
    def _():
        # Normalize by the GLOBAL batch size, not the per-tile batch.
        loss_ref[...] = loss_ref[...] * jnp.float32(1.0 / total_batch)


# ----------------------------- pallas_call wrappers -----------------------------

def mlp_forward(x, w1, b1, w2, b2, *, block_b):
    B, D = x.shape
    H = w1.shape[1]
    C = w2.shape[1]
    return pl.pallas_call(
        _mlp_forward_kernel,
        out_shape=jax.ShapeDtypeStruct((B, C), jnp.float32),
        grid=(B // block_b,),
        in_specs=[
            pl.BlockSpec((block_b, D), lambda i: (i, 0)),   # activations: tiled over batch
            pl.BlockSpec((D, H), lambda i: (0, 0)),         # weights: VMEM-resident
            pl.BlockSpec((1, H), lambda i: (0, 0)),
            pl.BlockSpec((H, C), lambda i: (0, 0)),
            pl.BlockSpec((1, C), lambda i: (0, 0)),
        ],
        out_specs=pl.BlockSpec((block_b, C), lambda i: (i, 0)),
        compiler_params=pltpu.CompilerParams(
            dimension_semantics=("parallel",)),
    )(x, w1, b1, w2, b2)


def mlp_loss(x, w1, b1, w2, b2, labels, *, num_classes, block_b):
    B, D = x.shape
    H = w1.shape[1]
    C = w2.shape[1]
    kernel = functools.partial(_mlp_loss_kernel,
                               num_classes=num_classes, total_batch=B)
    loss = pl.pallas_call(
        kernel,
        out_shape=jax.ShapeDtypeStruct((1, 1), jnp.float32),
        grid=(B // block_b,),
        in_specs=[
            pl.BlockSpec((block_b, D), lambda i: (i, 0)),
            pl.BlockSpec((D, H), lambda i: (0, 0)),
            pl.BlockSpec((1, H), lambda i: (0, 0)),
            pl.BlockSpec((H, C), lambda i: (0, 0)),
            pl.BlockSpec((1, C), lambda i: (0, 0)),
            pl.BlockSpec((block_b, 1), lambda i: (i, 0)),   # int32 labels (no one-hot)
        ],
        out_specs=pl.BlockSpec((1, 1), lambda i: (0, 0)),   # accumulator, resident
        compiler_params=pltpu.CompilerParams(
            dimension_semantics=("arbitrary",)),            # reduction over batch tiles
    )(x, w1, b1, w2, b2, labels)
    return loss[0, 0]


# ----------------------------- Synthetic LightningModule -----------------------------

class _TrainerState:
    def __init__(self):
        self.training = False
        self.testing = False
        self.sanity_checking = False
        self.validating = False
        self.predicting = False
        self.model = None
        self.require_backward_grad_sync = True

    def __bool__(self):
        return True


class SyntheticLightningModule:
    """Small MLP classifier standing in for the user's LightningModule."""

    def __init__(self, in_features=32, hidden=32, num_classes=8, block_b=64):
        self.in_features = in_features
        self.hidden = hidden
        self.num_classes = num_classes
        self.block_b = block_b
        self.d_pad = _round_up(in_features, LANE)
        self.h_pad = _round_up(hidden, LANE)
        self.c_pad = _round_up(num_classes, LANE)

        # Deterministic parameter init (synthetic, not a checkpoint load).
        k = jax.random.PRNGKey(42)
        k1, k2 = jax.random.split(k)
        w1 = (jax.random.normal(k1, (in_features, hidden), jnp.float32)
              / jnp.sqrt(jnp.float32(in_features)))
        w2 = (jax.random.normal(k2, (hidden, num_classes), jnp.float32)
              / jnp.sqrt(jnp.float32(hidden)))
        # Pad everything to 128-lane multiples ONCE at init.  Padded rows of
        # w1/w2 are zero (no contribution); padded logit columns are masked in
        # the loss kernel.  Matmul operands live in bf16.
        self.w1 = jnp.pad(w1, ((0, self.d_pad - in_features),
                               (0, self.h_pad - hidden))).astype(jnp.bfloat16)
        self.w2 = jnp.pad(w2, ((0, self.h_pad - hidden),
                               (0, self.c_pad - num_classes))).astype(jnp.bfloat16)
        self.b1 = jnp.zeros((1, self.h_pad), jnp.float32)
        self.b2 = jnp.zeros((1, self.c_pad), jnp.float32)

        self.trainer = _TrainerState()
        self.automatic_optimization = True
        self._ddp_params_and_buffers_to_ignore = []

    def _prep_x(self, x):
        B, d = x.shape
        assert d == self.in_features and B % self.block_b == 0
        return jnp.pad(x, ((0, 0), (0, self.d_pad - d))).astype(jnp.bfloat16)

    # plain forward -> logits
    def __call__(self, x):
        logits = mlp_forward(self._prep_x(x), self.w1, self.b1, self.w2,
                             self.b2, block_b=self.block_b)
        return logits[:, :self.num_classes]

    def _loss(self, batch):
        x, y = batch
        labels = y.astype(jnp.int32).reshape(-1, 1)
        return mlp_loss(self._prep_x(x), self.w1, self.b1, self.w2, self.b2,
                        labels, num_classes=self.num_classes,
                        block_b=self.block_b)

    def training_step(self, batch, batch_idx=0):
        return self._loss(batch)

    def validation_step(self, batch, batch_idx=0):
        return self._loss(batch)

    def test_step(self, batch, batch_idx=0):
        return self._loss(batch)

    def predict_step(self, batch, batch_idx=0):
        x, _ = batch
        return self(x)


# ----------------------------- The wrapper itself -----------------------------

class _LightningModuleWrapperBase:
    """JAX/Pallas port of pytorch_lightning.overrides.base._LightningModuleWrapperBase."""

    def __init__(self, pl_module):
        self.module = pl_module
        self._ddp_params_and_buffers_to_ignore = getattr(
            pl_module, "_ddp_params_and_buffers_to_ignore", [])

    def forward(self, *inputs, **kwargs):
        trainer = self.module.trainer
        if trainer and trainer.training:
            output = self.module.training_step(*inputs, **kwargs)
            if not self.module.automatic_optimization:
                trainer.model.require_backward_grad_sync = False
        elif trainer and trainer.testing:
            output = self.module.test_step(*inputs, **kwargs)
        elif trainer and (trainer.sanity_checking or trainer.validating):
            output = self.module.validation_step(*inputs, **kwargs)
        elif trainer and trainer.predicting:
            output = self.module.predict_step(*inputs, **kwargs)
        else:
            output = self.module(*inputs, **kwargs)
        return output

    __call__ = forward

    def on_post_move_to_device(self):
        pass


# ----------------------------- Demo -----------------------------

if __name__ == "__main__":
    B, D_IN, HIDDEN, C = 128, 32, 32, 8
    BLOCK_B = 64

    key = jax.random.PRNGKey(0)
    kx, ky = jax.random.split(key)
    x = jax.random.normal(kx, (B, D_IN), jnp.float32)
    y = jax.random.randint(ky, (B,), 0, C, jnp.int32)
    batch = (x, y)

    pl_module = SyntheticLightningModule(D_IN, HIDDEN, C, block_b=BLOCK_B)
    wrapper = _LightningModuleWrapperBase(pl_module)
    pl_module.trainer.model = wrapper

    # ---- pure-JAX reference (mirrors the kernel's bf16 casts) ----
    xp = jnp.pad(x, ((0, 0), (0, pl_module.d_pad - D_IN))).astype(jnp.bfloat16)
    h_ref = jnp.maximum(
        xp.astype(jnp.float32) @ pl_module.w1.astype(jnp.float32) + pl_module.b1, 0.0)
    logits_ref = (h_ref.astype(jnp.bfloat16).astype(jnp.float32)
                  @ pl_module.w2.astype(jnp.float32) + pl_module.b2)[:, :C]
    loss_ref = jnp.mean(
        jax.nn.logsumexp(logits_ref, axis=-1)
        - jnp.take_along_axis(logits_ref, y[:, None], axis=-1)[:, 0])

    # training state -> training_step (scalar loss)
    pl_module.trainer.training = True
    train_loss = wrapper(batch, 0)
    jax.block_until_ready(train_loss)

    # validating state -> validation_step
    pl_module.trainer.training = False
    pl_module.trainer.validating = True
    val_loss = wrapper(batch, 0)
    jax.block_until_ready(val_loss)

    # predicting state -> predict_step (logits)
    pl_module.trainer.validating = False
    pl_module.trainer.predicting = True
    preds = wrapper(batch, 0)
    jax.block_until_ready(preds)

    # no state -> plain forward
    pl_module.trainer.predicting = False
    logits = wrapper(x)
    jax.block_until_ready(logits)

    assert train_loss.shape == () and val_loss.shape == ()
    assert preds.shape == (B, C) and logits.shape == (B, C)
    assert jnp.allclose(logits, logits_ref, atol=5e-2, rtol=5e-2)
    assert jnp.allclose(preds, logits_ref, atol=5e-2, rtol=5e-2)
    assert jnp.allclose(train_loss, loss_ref, atol=5e-2, rtol=5e-2)
    assert jnp.allclose(val_loss, train_loss)
    print("KERNEL_OK")
</pallas_src>

<mosaic_0001>
module attributes {stable_mosaic.version = 11 : i64} {
  func.func @_mlp_loss_kernel(%arg0: i32, %arg1: memref<64x128xbf16, #tpu.memory_space<vmem>>, %arg2: memref<128x128xbf16, #tpu.memory_space<vmem>>, %arg3: memref<1x128xf32, #tpu.memory_space<vmem>>, %arg4: memref<128x128xbf16, #tpu.memory_space<vmem>>, %arg5: memref<1x128xf32, #tpu.memory_space<vmem>>, %arg6: memref<64x1xi32, #tpu.memory_space<vmem>>, %arg7: memref<1x1xf32, #tpu.memory_space<vmem>>) attributes {dimension_semantics = [#tpu.dimension_semantics<arbitrary>], iteration_bounds = array<i64: 2>, scalar_prefetch = 0 : i64, scratch_operands = 0 : i64, tpu.core_type = #tpu.core_type<tc>, window_params = [{transform_indices = @transform_0, window_bounds = array<i64: 64, 128>}, {pipeline_mode = #tpu.pipeline_mode<synchronous>, transform_indices = @transform_1, window_bounds = array<i64: 128, 128>}, {pipeline_mode = #tpu.pipeline_mode<synchronous>, transform_indices = @transform_2, window_bounds = array<i64: 1, 128>}, {pipeline_mode = #tpu.pipeline_mode<synchronous>, transform_indices = @transform_3, window_bounds = array<i64: 128, 128>}, {pipeline_mode = #tpu.pipeline_mode<synchronous>, transform_indices = @transform_4, window_bounds = array<i64: 1, 128>}, {transform_indices = @transform_5, window_bounds = array<i64: 64, 1>}, {pipeline_mode = #tpu.pipeline_mode<synchronous>, transform_indices = @transform_6, window_bounds = array<i64: 1, 1>}]} {
    %c0_i32 = arith.constant 0 : i32
    %0 = arith.cmpi eq, %arg0, %c0_i32 : i32
    %1 = arith.extui %0 : i1 to i32
    %c0_i32_0 = arith.constant 0 : i32
    %2 = arith.cmpi ne, %1, %c0_i32_0 : i32
    scf.if %2 {
      %cst_25 = arith.constant 0.000000e+00 : f32
      %47 = vector.broadcast %cst_25 : f32 to vector<1x1xf32>
      %c0_26 = arith.constant 0 : index
      %c0_27 = arith.constant 0 : index
      %48 = vector.load %arg7[%c0_26, %c0_27] : memref<1x1xf32, #tpu.memory_space<vmem>>, vector<1x1xf32>
      tpu.vector_store %arg7[%c0_26, %c0_27], %47 {strides = array<i32>} : memref<1x1xf32, #tpu.memory_space<vmem>>, vector<1x1xf32>,
    } else {
    }
    %c0 = arith.constant 0 : index
    %c0_1 = arith.constant 0 : index
    %3 = vector.load %arg1[%c0, %c0_1] : memref<64x128xbf16, #tpu.memory_space<vmem>>, vector<64x128xbf16>
    %c0_2 = arith.constant 0 : index
    %c0_3 = arith.constant 0 : index
    %4 = vector.load %arg2[%c0_2, %c0_3] : memref<128x128xbf16, #tpu.memory_space<vmem>>, vector<128x128xbf16>
    %cst = arith.constant dense<0.000000e+00> : vector<64x128xf32>
    %5 = tpu.matmul %3, %4, %cst {dimension_numbers = #tpu.dot_dimension_numbers<[1], [0], [0], [1], [0, 0, 1, 1], [], []>} : vector<64x128xbf16>, vector<128x128xbf16>, vector<64x128xf32> -> vector<64x128xf32>
    %c0_4 = arith.constant 0 : index
    %c0_5 = arith.constant 0 : index
    %6 = vector.load %arg3[%c0_4, %c0_5] : memref<1x128xf32, #tpu.memory_space<vmem>>, vector<1x128xf32>
    %7 = vector.broadcast %6 : vector<1x128xf32> to vector<64x128xf32>
    %8 = arith.addf %5, %7 : vector<64x128xf32>
    %cst_6 = arith.constant 0.000000e+00 : f32
    %9 = vector.broadcast %cst_6 : f32 to vector<64x128xf32>
    %10 = arith.maximumf %8, %9 : vector<64x128xf32>
    %11 = arith.truncf %10 : vector<64x128xf32> to vector<64x128xbf16>
    %c0_7 = arith.constant 0 : index
    %c0_8 = arith.constant 0 : index
    %12 = vector.load %arg4[%c0_7, %c0_8] : memref<128x128xbf16, #tpu.memory_space<vmem>>, vector<128x128xbf16>
    %cst_9 = arith.constant dense<0.000000e+00> : vector<64x128xf32>
    %13 = tpu.matmul %11, %12, %cst_9 {dimension_numbers = #tpu.dot_dimension_numbers<[1], [0], [0], [1], [0, 0, 1, 1], [], []>} : vector<64x128xbf16>, vector<128x128xbf16>, vector<64x128xf32> -> vector<64x128xf32>
    %c0_10 = arith.constant 0 : index
    %c0_11 = arith.constant 0 : index
    %14 = vector.load %arg5[%c0_10, %c0_11] : memref<1x128xf32, #tpu.memory_space<vmem>>, vector<1x128xf32>
    %15 = vector.broadcast %14 : vector<1x128xf32> to vector<64x128xf32>
    %16 = arith.addf %13, %15 : vector<64x128xf32>
    %17 = tpu.iota {dimensions = array<i32: 1>} : vector<64x128xi32>
    %c8_i32 = arith.constant 8 : i32
    %18 = vector.broadcast %c8_i32 : i32 to vector<64x128xi32>
    %19 = arith.cmpi slt, %17, %18 : vector<64x128xi32>
    %cst_12 = arith.constant -1.000000e+30 : f32
    %20 = vector.broadcast %cst_12 : f32 to vector<64x128xf32>
    %21 = arith.select %19, %16, %20 : vector<64x128xi1>, vector<64x128xf32>
    %cst_13 = arith.constant dense<0xFF800000> : vector<64xf32>
    %22 = vector.multi_reduction <maximumf>, %21, %cst_13 [1] : vector<64x128xf32> to vector<64xf32>
    %23 = vector.shape_cast %22 : vector<64xf32> to vector<64x1xf32>
    %24 = vector.broadcast %23 : vector<64x1xf32> to vector<64x128xf32>
    %25 = arith.subf %21, %24 : vector<64x128xf32>
    %26 = math.exp %25 : vector<64x128xf32>
    %cst_14 = arith.constant dense<0.000000e+00> : vector<64xf32>
    %27 = vector.multi_reduction <add>, %26, %cst_14 [1] : vector<64x128xf32> to vector<64xf32>
    %28 = vector.shape_cast %27 : vector<64xf32> to vector<64x1xf32>
    %29 = math.log %28 : vector<64x1xf32>
    %30 = arith.addf %23, %29 : vector<64x1xf32>
    %c0_15 = arith.constant 0 : index
    %c0_16 = arith.constant 0 : index
    %31 = vector.load %arg6[%c0_15, %c0_16] : memref<64x1xi32, #tpu.memory_space<vmem>>, vector<64x1xi32>
    %32 = vector.broadcast %31 : vector<64x1xi32> to vector<64x128xi32>
    %33 = arith.cmpi eq, %17, %32 : vector<64x128xi32>
    %cst_17 = arith.constant 0.000000e+00 : f32
    %34 = vector.broadcast %cst_17 : f32 to vector<64x128xf32>
    %35 = arith.select %33, %16, %34 : vector<64x128xi1>, vector<64x128xf32>
    %cst_18 = arith.constant dense<0.000000e+00> : vector<64xf32>
    %36 = vector.multi_reduction <add>, %35, %cst_18 [1] : vector<64x128xf32> to vector<64xf32>
    %37 = vector.shape_cast %36 : vector<64xf32> to vector<64x1xf32>
    %38 = arith.subf %30, %37 : vector<64x1xf32>
    %c0_19 = arith.constant 0 : index
    %c0_20 = arith.constant 0 : index
    %39 = vector.load %arg7[%c0_19, %c0_20] : memref<1x1xf32, #tpu.memory_space<vmem>>, vector<1x1xf32>
    %cst_21 = arith.constant dense<0.000000e+00> : vector<1xf32>
    %40 = vector.multi_reduction <add>, %38, %cst_21 [0] : vector<64x1xf32> to vector<1xf32>
    %41 = vector.shape_cast %40 : vector<1xf32> to vector<1x1xf32>
    %42 = arith.addf %39, %41 : vector<1x1xf32>
    %c0_22 = arith.constant 0 : index
    %c0_23 = arith.constant 0 : index
    %43 = vector.load %arg7[%c0_22, %c0_23] : memref<1x1xf32, #tpu.memory_space<vmem>>, vector<1x1xf32>
    tpu.vector_store %arg7[%c0_22, %c0_23], %42 {strides = array<i32>} : memref<1x1xf32, #tpu.memory_space<vmem>>, vector<1x1xf32>,
    %c1_i32 = arith.constant 1 : i32
    %44 = arith.cmpi eq, %arg0, %c1_i32 : i32
    %45 = arith.extui %44 : i1 to i32
    %c0_i32_24 = arith.constant 0 : i32
    %46 = arith.cmpi ne, %45, %c0_i32_24 : i32
    scf.if %46 {
      %c0_25 = arith.constant 0 : index
      %c0_26 = arith.constant 0 : index
      %47 = vector.load %arg7[%c0_25, %c0_26] : memref<1x1xf32, #tpu.memory_space<vmem>>, vector<1x1xf32>
      %cst_27 = arith.constant 7.812500e-03 : f32
      %48 = vector.broadcast %cst_27 : f32 to vector<1x1xf32>
      %49 = arith.mulf %47, %48 : vector<1x1xf32>
      %c0_28 = arith.constant 0 : index
      %c0_29 = arith.constant 0 : index
      %50 = vector.load %arg7[%c0_28, %c0_29] : memref<1x1xf32, #tpu.memory_space<vmem>>, vector<1x1xf32>
      tpu.vector_store %arg7[%c0_28, %c0_29], %49 {strides = array<i32>} : memref<1x1xf32, #tpu.memory_space<vmem>>, vector<1x1xf32>,
    } else {
    }
    return
  }
  func.func @transform_0(%arg0: i32) -> (i32, i32) {
    %c0_i32 = arith.constant 0 : i32
    %c0_i32_0 = arith.constant 0 : i32
    return %arg0, %c0_i32 : i32, i32
  }
  func.func @transform_1(%arg0: i32) -> (i32, i32) {
    %c0_i32 = arith.constant 0 : i32
    %c0_i32_0 = arith.constant 0 : i32
    %c0_i32_1 = arith.constant 0 : i32
    return %c0_i32, %c0_i32_0 : i32, i32
  }
  func.func @transform_2(%arg0: i32) -> (i32, i32) {
    %c0_i32 = arith.constant 0 : i32
    %c0_i32_0 = arith.constant 0 : i32
    %c0_i32_1 = arith.constant 0 : i32
    return %c0_i32, %c0_i32_0 : i32, i32
  }
  func.func @transform_3(%arg0: i32) -> (i32, i32) {
    %c0_i32 = arith.constant 0 : i32
    %c0_i32_0 = arith.constant 0 : i32
    %c0_i32_1 = arith.constant 0 : i32
    return %c0_i32, %c0_i32_0 : i32, i32
  }
  func.func @transform_4(%arg0: i32) -> (i32, i32) {
    %c0_i32 = arith.constant 0 : i32
    %c0_i32_0 = arith.constant 0 : i32
    %c0_i32_1 = arith.constant 0 : i32
    return %c0_i32, %c0_i32_0 : i32, i32
  }
  func.func @transform_5(%arg0: i32) -> (i32, i32) {
    %c0_i32 = arith.constant 0 : i32
    %c0_i32_0 = arith.constant 0 : i32
    return %arg0, %c0_i32 : i32, i32
  }
  func.func @transform_6(%arg0: i32) -> (i32, i32) {
    %c0_i32 = arith.constant 0 : i32
    %c0_i32_0 = arith.constant 0 : i32
    %c0_i32_1 = arith.constant 0 : i32
    return %c0_i32, %c0_i32_0 : i32, i32
  }
}

</mosaic_0001>

<llo_original>
// kernel: tpu_custom_call.1
$region0: #{tpu_custom_call.1}
  #allocation0 [shape = 'u32[]', space=smem, size = 0x4, offset = 0x4, fixed_abs, tag = 'smem constant byte address 0x4 - core index']
  #allocation1 [shape = 'u32[72,128]{1,0:T(1,128)}', space=vmem, size = 0x9000, scoped, tag = 'internal scratch']
  %s0 = inlined_call_operand.vmem [shape: bf16[128,128], index: 0, kind: input, shape index: {}]
  %s1 = inlined_call_operand.vmem [shape: bf16[128,128], index: 1, kind: input, shape index: {}]
  %s2 = inlined_call_operand.vmem [shape: f32[1,128], index: 2, kind: input, shape index: {}]
  %s3 = inlined_call_operand.hbm [shape: bf16[128,128], index: 3, kind: input, shape index: {}]
  %s4 = inlined_call_operand.vmem [shape: f32[1,128], index: 4, kind: input, shape index: {}]
  %s5 = inlined_call_operand.vmem [shape: s32[128,1], index: 5, kind: input, shape index: {}]
  %s6 = inlined_call_operand.hbm [shape: f32[1,1], index: 6, kind: output, shape index: {}]
  %s7 = sld [smem:[#allocation0]]
  $region69: #{tpu_custom_call.1} parent=0
    _
  %s9 = ssub.s32 1, %s7
  %s10 = scalar_select 0, %s9, %s7
  $region1: #{tpu_custom_call.1} parent=0
    #allocation2 [shape = 'u8[32768]{0}', space=vmem, size = 0x8000, scoped, tag = 'input window, operand 3, single buffered']
    #allocation3 [shape = 's32[2]{0}', space=sflag, size = 0x8, scoped, tag = 'scoped memory for tpu_custom_call.1']
    #allocation4 [shape = 's32[2]{0}', space=sflag, size = 0x8, scoped, tag = 'scoped memory for tpu_custom_call.1']
    #allocation5 [shape = 'u8[512]{0}', space=vmem, size = 0x400, scoped, tag = 'output window, operand 0, single buffered']
    %11 = vsyncpa [#allocation3], 0
    %12 = vsyncpa [#allocation4], 0
    loop: start=0, step=1, limit=4
    $region2: #{tpu_custom_call.1} parent=1 // loop_pre_header
      _
    $region3: #{tpu_custom_call.1} parent=1 // loop_header
      %s14 = sphi 0, %s18
      %p15 = scmp.ge.s32.totalorder %s14, 4
      %s24 = sphi 0, %s26
      %s27 = sphi 0, %s24
      %s28 = sphi 0, %s27
      %s44 = sphi 0, %s28
      %s48 = sphi 0, %s48
      %s50 = sphi 0, %s48
      %s51 = sphi 0, %s50
      %s65 = sphi 0, %s51
      %s69 = sphi 0, %s69
      %s71 = sphi 0, %s69
      %s72 = sphi 0, %s71
      %s86 = sphi 0, %s72
      %s90 = sphi 0, %s90
      %s92 = sphi 0, %s90
      %s93 = sphi 0, %s92
      %s107 = sphi 0, %s93
      %s111 = sphi 0, %s111
      %s113 = sphi 0, %s111
      %s114 = sphi 0, %s113
      %s128 = sphi 0, %s114
      %s134 = sphi 0, %s136
      %s137 = sphi 0, %s134
      %s138 = sphi 0, %s137
      %s154 = sphi 0, %s138
      %s158 = sphi 0, %s158
      %s160 = sphi 0, %s158
      %s161 = sphi 0, %s160
      %s175 = sphi 0, %s161
    $region4: #{tpu_custom_call.1} parent=1 // loop_header_branch
      %17 = sbr.rel (%p15) target = $region8
    $region5: #{tpu_custom_call.1} parent=1 // loop_body
      %s19 = ssub.s32 %s14, 1
      %s20 = ssub.s32 %s14, 2
      %s21 = sadd.s32 %s14, 1
      %s22 = ssub.s32 %s14, %s21
      %p23 = scmp.eq.s32.totalorder %s22, 0
      %s25 = sadd.s32 %s24, 1
      %s26 = scalar_select %p23, %s24, %s25
      %p29 = pneg %p23
      %p30 = scmp.eq.s32.totalorder %s14, 1
      %p31 = por %p29, %p30
      %p32 = scmp.ne.s32.totalorder %s24, %s27
      %p33 = scmp.eq.s32.totalorder %s14, 0
      %p34 = por %p32, %p33
      %p35 = scmp.ne.s32.totalorder %s24, %s27
      %p36 = scmp.eq.s32.totalorder %s19, 1
      %p37 = por %p35, %p36
      %p38 = scmp.ne.s32.totalorder %s27, %s28
      %p39 = scmp.eq.s32.totalorder %s19, 0
      %p40 = por %p38, %p39
      %p41 = scmp.ne.s32.totalorder %s27, %s28
      %p42 = scmp.eq.s32.totalorder %s20, 1
      %p43 = por %p41, %p42
      %p45 = scmp.ne.s32.totalorder %s28, %s44
      %p46 = scmp.eq.s32.totalorder %s20, 0
      %p47 = por %p45, %p46
      %s49 = sadd.s32 %s48, 1
      %p52 = scmp.eq.s32.totalorder %s14, 1
      %p53 = scmp.ne.s32.totalorder %s48, %s50
      %p54 = scmp.eq.s32.totalorder %s14, 0
      %p55 = por %p53, %p54
      %p56 = scmp.ne.s32.totalorder %s48, %s50
      %p57 = scmp.eq.s32.totalorder %s19, 1
      %p58 = por %p56, %p57
      %p59 = scmp.ne.s32.totalorder %s50, %s51
      %p60 = scmp.eq.s32.totalorder %s19, 0
      %p61 = por %p59, %p60
      %p62 = scmp.ne.s32.totalorder %s50, %s51
      %p63 = scmp.eq.s32.totalorder %s20, 1
      %p64 = por %p62, %p63
      %p66 = scmp.ne.s32.totalorder %s51, %s65
      %p67 = scmp.eq.s32.totalorder %s20, 0
      %p68 = por %p66, %p67
      %s70 = sadd.s32 %s69, 1
      %p73 = scmp.eq.s32.totalorder %s14, 1
      %p74 = scmp.ne.s32.totalorder %s69, %s71
      %p75 = scmp.eq.s32.totalorder %s14, 0
      %p76 = por %p74, %p75
      %p77 = scmp.ne.s32.totalorder %s69, %s71
      %p78 = scmp.eq.s32.totalorder %s19, 1
      %p79 = por %p77, %p78
      %p80 = scmp.ne.s32.totalorder %s71, %s72
      %p81 = scmp.eq.s32.totalorder %s19, 0
      %p82 = por %p80, %p81
      %p83 = scmp.ne.s32.totalorder %s71, %s72
      %p84 = scmp.eq.s32.totalorder %s20, 1
      %p85 = por %p83, %p84
      %p87 = scmp.ne.s32.totalorder %s72, %s86
      %p88 = scmp.eq.s32.totalorder %s20, 0
      %p89 = por %p87, %p88
      %s91 = sadd.s32 %s90, 1
      %p94 = scmp.eq.s32.totalorder %s14, 1
      %p95 = scmp.ne.s32.totalorder %s90, %s92
      %p96 = scmp.eq.s32.totalorder %s14, 0
      %p97 = por %p95, %p96
      %p98 = scmp.ne.s32.totalorder %s90, %s92
      %p99 = scmp.eq.s32.totalorder %s19, 1
      %p100 = por %p98, %p99
      %p101 = scmp.ne.s32.totalorder %s92, %s93
      %p102 = scmp.eq.s32.totalorder %s19, 0
      %p103 = por %p101, %p102
      %p104 = scmp.ne.s32.totalorder %s92, %s93
      %p105 = scmp.eq.s32.totalorder %s20, 1
      %p106 = por %p104, %p105
      %p108 = scmp.ne.s32.totalorder %s93, %s107
      %p109 = scmp.eq.s32.totalorder %s20, 0
      %p110 = por %p108, %p109
      %s112 = sadd.s32 %s111, 1
      %p115 = scmp.eq.s32.totalorder %s14, 1
      %p116 = scmp.ne.s32.totalorder %s111, %s113
      %p117 = scmp.eq.s32.totalorder %s14, 0
      %p118 = por %p116, %p117
      %p119 = scmp.ne.s32.totalorder %s111, %s113
      %p120 = scmp.eq.s32.totalorder %s19, 1
      %p121 = por %p119, %p120
      %p122 = scmp.ne.s32.totalorder %s113, %s114
      %p123 = scmp.eq.s32.totalorder %s19, 0
      %p124 = por %p122, %p123
      %p125 = scmp.ne.s32.totalorder %s113, %s114
      %p126 = scmp.eq.s32.totalorder %s20, 1
      %p127 = por %p125, %p126
      %p129 = scmp.ne.s32.totalorder %s114, %s128
      %p130 = scmp.eq.s32.totalorder %s20, 0
      %p131 = por %p129, %p130
      %s132 = ssub.s32 %s14, %s21
      %p133 = scmp.eq.s32.totalorder %s132, 0
      %s135 = sadd.s32 %s134, 1
      %s136 = scalar_select %p133, %s134, %s135
      %p139 = pneg %p133
      %p140 = scmp.eq.s32.totalorder %s14, 1
      %p141 = por %p139, %p140
      %p142 = scmp.ne.s32.totalorder %s134, %s137
      %p143 = scmp.eq.s32.totalorder %s14, 0
      %p144 = por %p142, %p143
      %p145 = scmp.ne.s32.totalorder %s134, %s137
      %p146 = scmp.eq.s32.totalorder %s19, 1
      %p147 = por %p145, %p146
      %p148 = scmp.ne.s32.totalorder %s137, %s138
      %p149 = scmp.eq.s32.totalorder %s19, 0
      %p150 = por %p148, %p149
      %p151 = scmp.ne.s32.totalorder %s137, %s138
      %p152 = scmp.eq.s32.totalorder %s20, 1
      %p153 = por %p151, %p152
      %p155 = scmp.ne.s32.totalorder %s138, %s154
      %p156 = scmp.eq.s32.totalorder %s20, 0
      %p157 = por %p155, %p156
      %s159 = sadd.s32 %s158, 1
      %p162 = scmp.eq.s32.totalorder %s14, 1
      %p163 = scmp.ne.s32.totalorder %s158, %s160
      %p164 = scmp.eq.s32.totalorder %s14, 0
      %p165 = por %p163, %p164
      %p166 = scmp.ne.s32.totalorder %s158, %s160
      %p167 = scmp.eq.s32.totalorder %s19, 1
      %p168 = por %p166, %p167
      %p169 = scmp.ne.s32.totalorder %s160, %s161
      %p170 = scmp.eq.s32.totalorder %s19, 0
      %p171 = por %p169, %p170
      %p172 = scmp.ne.s32.totalorder %s160, %s161
      %p173 = scmp.eq.s32.totalorder %s20, 1
      %p174 = por %p172, %p173
      %p176 = scmp.ne.s32.totalorder %s161, %s175
      %p177 = scmp.eq.s32.totalorder %s20, 0
      %p178 = por %p176, %p177
      %p179 = scmp.le.s32.totalorder 1, %s14
      %p180 = scmp.lt.s32.totalorder %s14, 3
      %p181 = pnand %p179, %p180
      %p182 = pneg %p181
      // Predicated region
      $region9: #{tpu_custom_call.1} parent=5 // pred_check
        _
      $region10: #{tpu_custom_call.1} parent=5 // pred_check_branch
        %184 = sbr.rel (%p181) target = $region12
      $region11: #{tpu_custom_call.1} parent=5 // pred_region
        %s185 = ssub.s32 %s14, 1
        // Predicated region
        $region13: #{tpu_custom_call.1} parent=11 // pred_check
          %p186 = pneg %p61
        $region14: #{tpu_custom_call.1} parent=11 // pred_check_branch
          %188 = sbr.rel (%p186) target = $region16
        $region15: #{tpu_custom_call.1} parent=11 // pred_region
          _
        $region16: #{tpu_custom_call.1} parent=11 // pred_fallthru
          _
        // Predicated region
        $region17: #{tpu_custom_call.1} parent=11 // pred_check
          %p189 = pneg %p82
        $region18: #{tpu_custom_call.1} parent=11 // pred_check_branch
          %191 = sbr.rel (%p189) target = $region20
        $region19: #{tpu_custom_call.1} parent=11 // pred_region
          _
        $region20: #{tpu_custom_call.1} parent=11 // pred_fallthru
          _
        // Predicated region
        $region21: #{tpu_custom_call.1} parent=11 // pred_check
          %p192 = pneg %p103
        $region22: #{tpu_custom_call.1} parent=11 // pred_check_branch
          %194 = sbr.rel (%p192) target = $region24
        $region23: #{tpu_custom_call.1} parent=11 // pred_region
          %196 = vsyncadd [#allocation3], 0
          %s197 = sshll.u32 %s3, 4
          %s198 = int_to_ptr.hbm [resolvable:$true] %s197
          %s199 = sshll.u32 [#allocation2], 4
          %s200 = int_to_ptr.vmem [resolvable:$true] %s199
          %205 = dma.hbm_to_vmem [thread:$0]  %s198, 1024, %s200, [#allocation3], 64, 64, 4
        $region24: #{tpu_custom_call.1} parent=11 // pred_fallthru
          _
        // Predicated region
        $region25: #{tpu_custom_call.1} parent=11 // pred_check
          %p206 = pneg %p124
        $region26: #{tpu_custom_call.1} parent=11 // pred_check_branch
          %208 = sbr.rel (%p206) target = $region28
        $region27: #{tpu_custom_call.1} parent=11 // pred_region
          _
        $region28: #{tpu_custom_call.1} parent=11 // pred_fallthru
          _
      $region12: #{tpu_custom_call.1} parent=5 // pred_fallthru
        _
      %p209 = scmp.lt.s32.totalorder %s14, 2
      // Predicated region
      $region29: #{tpu_custom_call.1} parent=5 // pred_check
        %p210 = pneg %p209
      $region30: #{tpu_custom_call.1} parent=5 // pred_check_branch
        %212 = sbr.rel (%p210) target = $region32
      $region31: #{tpu_custom_call.1} parent=5 // pred_region
        // Predicated region
        $region33: #{tpu_custom_call.1} parent=31 // pred_check
          %p213 = pneg %p34
        $region34: #{tpu_custom_call.1} parent=31 // pred_check_branch
          %215 = sbr.rel (%p213) target = $region36
        $region35: #{tpu_custom_call.1} parent=31 // pred_region
          %s216 = smul.u32 8, %s14
          %p217 = scmp.lt.s32.totalorder %s216, 15
          %s218 = scalar_select %p217, %s216, 15
          %s219 = smul.addr %s218, 4
          %s220 = scalar_lea.vmem %s0, %s219
          %s221 = smul.u32 8, %s14
        $region36: #{tpu_custom_call.1} parent=31 // pred_fallthru
          _
        // Predicated region
        $region37: #{tpu_custom_call.1} parent=31 // pred_check
          %p222 = pneg %p144
        $region38: #{tpu_custom_call.1} parent=31 // pred_check_branch
          %224 = sbr.rel (%p222) target = $region40
        $region39: #{tpu_custom_call.1} parent=31 // pred_region
          %s225 = smul.u32 8, %s14
          %p226 = scmp.lt.s32.totalorder %s225, 15
          %s227 = scalar_select %p226, %s225, 15
          %s228 = smul.addr %s227, 8
          %s229 = scalar_lea.vmem %s5, %s228
          %s230 = smul.u32 8, %s14
        $region40: #{tpu_custom_call.1} parent=31 // pred_fallthru
          _
      $region32: #{tpu_custom_call.1} parent=5 // pred_fallthru
        _
      %p231 = scmp.le.s32.totalorder 1, %s14
      %p232 = scmp.lt.s32.totalorder %s14, 3
      %p233 = pnand %p231, %p232
      %p234 = pneg %p233
      // Predicated region
      $region41: #{tpu_custom_call.1} parent=5 // pred_check
        _
      $region42: #{tpu_custom_call.1} parent=5 // pred_check_branch
        %236 = sbr.rel (%p233) target = $region44
      $region43: #{tpu_custom_call.1} parent=5 // pred_region
        %s237 = ssub.s32 %s14, 1
        // Predicated region
        $region45: #{tpu_custom_call.1} parent=43 // pred_check
          %p238 = pneg %p103
        $region46: #{tpu_custom_call.1} parent=43 // pred_check_branch
          %240 = sbr.rel (%p238) target = $region48
        $region47: #{tpu_custom_call.1} parent=43 // pred_region
          %242 = dma.done [#allocation3], 1024
        $region48: #{tpu_custom_call.1} parent=43 // pred_fallthru
          _
        %s243 = smul.u32 8, %s19
        %p244 = scmp.lt.s32.totalorder %s243, 15
        %s245 = scalar_select %p244, %s243, 15
        %s246 = smul.addr %s245, 4
        %s247 = scalar_lea.vmem %s0, %s246
        %p248 = pneg %p40
        %p249 = pneg %p37
        %p250 = pneg %p61
        %p251 = pneg %p58
        %p252 = pneg %p82
        %p253 = pneg %p79
        %p254 = pneg %p103
        %p255 = pneg %p100
        %p256 = pneg %p124
        %p257 = pneg %p121
        %s258 = smul.u32 8, %s19
        %p259 = scmp.lt.s32.totalorder %s258, 15
        %s260 = scalar_select %p259, %s258, 15
        %s261 = smul.addr %s260, 8
        %s262 = scalar_lea.vmem %s5, %s261
        %p263 = pneg %p150
        %p264 = pneg %p147
        %p265 = pneg %p171
        %p266 = pneg %p168
        %s267 = smul.u32 8, %s19
        %p268 = scmp.lt.s32.totalorder %s267, 15
        %s269 = scalar_select %p268, %s267, 15
        %s270 = smul.addr %s269, 4
        %s271 = scalar_lea.vmem %s0, %s270
        %s272 = smul.u32 8, %s19
        %s273 = smul.u32 8, %s19
        %p274 = scmp.lt.s32.totalorder %s273, 15
        %s275 = scalar_select %p274, %s273, 15
        %s276 = smul.addr %s275, 8
        %s277 = scalar_lea.vmem %s5, %s276
        %s278 = smul.u32 8, %s19
        %p279 = scmp.eq.s32.totalorder %s19, 0
        // Predicated region
        $region49: #{tpu_custom_call.1} parent=43 // pred_check
          %p280 = pneg %p279
        $region50: #{tpu_custom_call.1} parent=43 // pred_check_branch
          %282 = sbr.rel (%p280) target = $region52
        $region51: #{tpu_custom_call.1} parent=43 // pred_region
          %vm283 = vcmask 0
          %284 = vst.msk [vmem:[#allocation5] sm:$0x1] %vm283, 0.0
        $region52: #{tpu_custom_call.1} parent=43 // pred_fallthru
          _
        %v285 = vld [vmem:[%s271] sm:$0xf]
        %v286 = vld [vmem:[%s271 + $0x4] sm:$0xf]
        %v287 = vld [vmem:[%s271 + $0x8] sm:$0xf]
        %v288 = vld [vmem:[%s271 + $0xc] sm:$0xf]
        %v289 = vld [vmem:[%s271 + $0x10] sm:$0xf]
        %v290 = vld [vmem:[%s271 + $0x14] sm:$0xf]
        %v291 = vld [vmem:[%s271 + $0x18] sm:$0xf]
        %v292 = vld [vmem:[%s271 + $0x1c] sm:$0xf]
        %v293 = vld [vmem:[%s1] sm:$0xf]
        %v294 = vld [vmem:[%s1 + $0x4] sm:$0xf]
        %v295 = vld [vmem:[%s1 + $0x8] sm:$0xf]
        %v296 = vld [vmem:[%s1 + $0xc] sm:$0xf]
        %v297 = vld [vmem:[%s1 + $0x10] sm:$0xf]
        %v298 = vld [vmem:[%s1 + $0x14] sm:$0xf]
        %v299 = vld [vmem:[%s1 + $0x18] sm:$0xf]
        %v300 = vld [vmem:[%s1 + $0x1c] sm:$0xf]
        %v301 = vld [vmem:[%s1 + $0x20] sm:$0xf]
        %v302 = vld [vmem:[%s1 + $0x24] sm:$0xf]
        %v303 = vld [vmem:[%s1 + $0x28] sm:$0xf]
        %v304 = vld [vmem:[%s1 + $0x2c] sm:$0xf]
        %v305 = vld [vmem:[%s1 + $0x30] sm:$0xf]
        %v306 = vld [vmem:[%s1 + $0x34] sm:$0xf]
        %v307 = vld [vmem:[%s1 + $0x38] sm:$0xf]
        %v308 = vld [vmem:[%s1 + $0x3c] sm:$0xf]
        %v309 = vld [vmem:[%s2] sm:$0x1]
        %v311 = vperm.slane %v309, 0
        %v321 = vunpack.c.l.b16 %v285
        %v322 = vunpack.c.l.b16 %v286
        %v323 = vunpack.c.l.b16 %v287
        %v324 = vunpack.c.l.b16 %v288
        %v325 = vunpack.c.l.b16 %v289
        %v326 = vunpack.c.l.b16 %v290
        %v327 = vunpack.c.l.b16 %v291
        %v328 = vunpack.c.l.b16 %v292
        %v329 = vpack.c.b16 %v322, %v321
        %v330 = vpack.c.b16 %v324, %v323
        %v331 = vpack.c.b16 %v326, %v325
        %v332 = vpack.c.b16 %v328, %v327
        %v353 = vunpack.c.l.b16 %v293
        %v354 = vunpack.c.l.b16 %v294
        %v355 = vunpack.c.l.b16 %v295
        %v356 = vunpack.c.l.b16 %v296
        %v357 = vunpack.c.l.b16 %v297
        %v358 = vunpack.c.l.b16 %v298
        %v359 = vunpack.c.l.b16 %v299
        %v360 = vunpack.c.l.b16 %v300
        %v361 = vunpack.c.l.b16 %v301
        %v362 = vunpack.c.l.b16 %v302
        %v363 = vunpack.c.l.b16 %v303
        %v364 = vunpack.c.l.b16 %v304
        %v365 = vunpack.c.l.b16 %v305
        %v366 = vunpack.c.l.b16 %v306
        %v367 = vunpack.c.l.b16 %v307
        %v368 = vunpack.c.l.b16 %v308
        %v369 = vpack.c.b16 %v354, %v353
        %v370 = vpack.c.b16 %v356, %v355
        %v371 = vpack.c.b16 %v358, %v357
        %v372 = vpack.c.b16 %v360, %v359
        %v373 = vpack.c.b16 %v362, %v361
        %v374 = vpack.c.b16 %v364, %v363
        %v375 = vpack.c.b16 %v366, %v365
        %v376 = vpack.c.b16 %v368, %v367
        %385 = vmatpush.bf16.msra.mxu0 %v376
        %386 = vmatpush.bf16.msra.mxu0 %v375
        %387 = vmatpush.bf16.msra.mxu0 %v374
        %388 = vmatpush.bf16.msra.mxu0 %v373
        %389 = vmatpush.bf16.msra.mxu0 %v372
        %390 = vmatpush.bf16.msra.mxu0 %v371
        %391 = vmatpush.bf16.msra.mxu0 %v370
        %392 = vmatpush.bf16.msra.mxu0 %v369
        %393 = vmatmul.bf16.gmra.mxu0 %v329
        %v394 = vpop.f32.mrf.mxu0
        %v395 = vadd.f32 %v311, %v394
        %v396 = vpop.f32.mrf.mxu0
        %v397 = vadd.f32 %v311, %v396
        %398 = vmatmul.bf16.gmra.mxu0 %v330
        %v399 = vpop.f32.mrf.mxu0
        %v400 = vadd.f32 %v311, %v399
        %v401 = vpop.f32.mrf.mxu0
        %v402 = vadd.f32 %v311, %v401
        %403 = vmatmul.bf16.gmra.mxu0 %v331
        %v404 = vpop.f32.mrf.mxu0
        %v405 = vadd.f32 %v311, %v404
        %v406 = vpop.f32.mrf.mxu0
        %v407 = vadd.f32 %v311, %v406
        %408 = vmatmul.bf16.gmra.mxu0 %v332
        %v409 = vpop.f32.mrf.mxu0
        %v410 = vadd.f32 %v311, %v409
        %v411 = vpop.f32.mrf.mxu0
        %v412 = vadd.f32 %v311, %v411
        %413 = vdwg.mxu0
        %v414 = vmax.f32 %v395, 0.0
        %v415 = vmax.f32 %v397, 0.0
        %v416 = vmax.f32 %v400, 0.0
        %v417 = vmax.f32 %v402, 0.0
        %v418 = vmax.f32 %v405, 0.0
        %v419 = vmax.f32 %v407, 0.0
        %v420 = vmax.f32 %v410, 0.0
        %v421 = vmax.f32 %v412, 0.0
        %v422 = vpack.c.bf16 %v415, %v414
        %v423 = vpack.c.bf16 %v417, %v416
        %v424 = vpack.c.bf16 %v419, %v418
        %v425 = vpack.c.bf16 %v421, %v420
        %v426 = vld [vmem:[#allocation2] sm:$0xf]
        %v427 = vld [vmem:[#allocation2 + $0x4] sm:$0xf]
        %v428 = vld [vmem:[#allocation2 + $0x8] sm:$0xf]
        %v429 = vld [vmem:[#allocation2 + $0xc] sm:$0xf]
        %v430 = vld [vmem:[#allocation2 + $0x10] sm:$0xf]
        %v431 = vld [vmem:[#allocation2 + $0x14] sm:$0xf]
        %v432 = vld [vmem:[#allocation2 + $0x18] sm:$0xf]
        %v433 = vld [vmem:[#allocation2 + $0x1c] sm:$0xf]
        %v434 = vld [vmem:[#allocation2 + $0x20] sm:$0xf]
        %v435 = vld [vmem:[#allocation2 + $0x24] sm:$0xf]
        %v436 = vld [vmem:[#allocation2 + $0x28] sm:$0xf]
        %v437 = vld [vmem:[#allocation2 + $0x2c] sm:$0xf]
        %v438 = vld [vmem:[#allocation2 + $0x30] sm:$0xf]
        %v439 = vld [vmem:[#allocation2 + $0x34] sm:$0xf]
        %v440 = vld [vmem:[#allocation2 + $0x38] sm:$0xf]
        %v441 = vld [vmem:[#allocation2 + $0x3c] sm:$0xf]
        %v442 = vld [vmem:[%s4] sm:$0x1]
        %v444 = vperm.slane %v442, 0
        %v462 = vunpack.c.l.b16 %v426
        %v463 = vunpack.c.l.b16 %v427
        %v464 = vunpack.c.l.b16 %v428
        %v465 = vunpack.c.l.b16 %v429
        %v466 = vunpack.c.l.b16 %v430
        %v467 = vunpack.c.l.b16 %v431
        %v468 = vunpack.c.l.b16 %v432
        %v469 = vunpack.c.l.b16 %v433
        %v470 = vunpack.c.l.b16 %v434
        %v471 = vunpack.c.l.b16 %v435
        %v472 = vunpack.c.l.b16 %v436
        %v473 = vunpack.c.l.b16 %v437
        %v474 = vunpack.c.l.b16 %v438
        %v475 = vunpack.c.l.b16 %v439
        %v476 = vunpack.c.l.b16 %v440
        %v477 = vunpack.c.l.b16 %v441
        %v478 = vpack.c.b16 %v463, %v462
        %v479 = vpack.c.b16 %v465, %v464
        %v480 = vpack.c.b16 %v467, %v466
        %v481 = vpack.c.b16 %v469, %v468
        %v482 = vpack.c.b16 %v471, %v470
        %v483 = vpack.c.b16 %v473, %v472
        %v484 = vpack.c.b16 %v475, %v474
        %v485 = vpack.c.b16 %v477, %v476
        %494 = vmatpush.bf16.msra.mxu0 %v485
        %495 = vmatpush.bf16.msra.mxu0 %v484
        %496 = vmatpush.bf16.msra.mxu0 %v483
        %497 = vmatpush.bf16.msra.mxu0 %v482
        %498 = vmatpush.bf16.msra.mxu0 %v481
        %499 = vmatpush.bf16.msra.mxu0 %v480
        %500 = vmatpush.bf16.msra.mxu0 %v479
        %501 = vmatpush.bf16.msra.mxu0 %v478
        %502 = vmatmul.bf16.gmra.mxu0 %v422
        %v503 = vpop.f32.mrf.mxu0
        %v504 = vadd.f32 %v444, %v503
        %v505 = vpop.f32.mrf.mxu0
        %v506 = vadd.f32 %v444, %v505
        %507 = vmatmul.bf16.gmra.mxu0 %v423
        %v508 = vpop.f32.mrf.mxu0
        %v509 = vadd.f32 %v444, %v508
        %v510 = vpop.f32.mrf.mxu0
        %v511 = vadd.f32 %v444, %v510
        %512 = vmatmul.bf16.gmra.mxu0 %v424
        %v513 = vpop.f32.mrf.mxu0
        %v514 = vadd.f32 %v444, %v513
        %v515 = vpop.f32.mrf.mxu0
        %v516 = vadd.f32 %v444, %v515
        %517 = vmatmul.bf16.gmra.mxu0 %v425
        %v518 = vpop.f32.mrf.mxu0
        %v519 = vadd.f32 %v444, %v518
        %v520 = vpop.f32.mrf.mxu0
        %v521 = vadd.f32 %v444, %v520
        %522 = vdwg.mxu0
        %v523 = vlaneseq
        %v524 = vand.u32 %v523, 127
        %vm525 = vcmp.lt.s32.totalorder %v524, 8
        %v526 = vsel %vm525, %v504, -1e+30
        %v527 = vsel %vm525, %v506, -1e+30
        %v528 = vsel %vm525, %v509, -1e+30
        %v529 = vsel %vm525, %v511, -1e+30
        %v530 = vsel %vm525, %v514, -1e+30
        %v531 = vsel %vm525, %v516, -1e+30
        %v532 = vsel %vm525, %v519, -1e+30
        %v533 = vsel %vm525, %v521, -1e+30
        %534 = vmax.xlane.f32.xlu0 %v526
        %v535 = vpop.xlane.xlu0 %534
        %536 = vmax.xlane.f32.xlu0 %v527
        %v537 = vpop.xlane.xlu0 %536
        %538 = vmax.xlane.f32.xlu0 %v528
        %v539 = vpop.xlane.xlu0 %538
        %540 = vmax.xlane.f32.xlu0 %v529
        %v541 = vpop.xlane.xlu0 %540
        %542 = vmax.xlane.f32.xlu0 %v530
        %v543 = vpop.xlane.xlu0 %542
        %544 = vmax.xlane.f32.xlu0 %v531
        %v545 = vpop.xlane.xlu0 %544
        %546 = vmax.xlane.f32.xlu0 %v532
        %v547 = vpop.xlane.xlu0 %546
        %548 = vmax.xlane.f32.xlu0 %v533
        %v549 = vpop.xlane.xlu0 %548
        %v550 = vsub.f32 %v526, %v535
        %v551 = vsub.f32 %v527, %v537
        %v552 = vsub.f32 %v528, %v539
        %v553 = vsub.f32 %v529, %v541
        %v554 = vsub.f32 %v530, %v543
        %v555 = vsub.f32 %v531, %v545
        %v556 = vsub.f32 %v532, %v547
        %v557 = vsub.f32 %v533, %v549
        %v558 = vmul.f32 %v550, 1.442695
        %v559 = vpow.pop %v558
        %v560 = vmul.f32 %v551, 1.442695
        %v561 = vpow.pop %v560
        %v562 = vmul.f32 %v552, 1.442695
        %v563 = vpow.pop %v562
        %v564 = vmul.f32 %v553, 1.442695
        %v565 = vpow.pop %v564
        %v566 = vmul.f32 %v554, 1.442695
        %v567 = vpow.pop %v566
        %v568 = vmul.f32 %v555, 1.442695
        %v569 = vpow.pop %v568
        %v570 = vmul.f32 %v556, 1.442695
        %v571 = vpow.pop %v570
        %v572 = vmul.f32 %v557, 1.442695
        %v573 = vpow.pop %v572
        %574 = vadd.xlane.f32.xlu0 %v559
        %v575 = vpop.xlane.xlu0 %574
        %576 = vadd.xlane.f32.xlu0 %v561
        %v577 = vpop.xlane.xlu0 %576
        %578 = vadd.xlane.f32.xlu0 %v563
        %v579 = vpop.xlane.xlu0 %578
        %580 = vadd.xlane.f32.xlu0 %v565
        %v581 = vpop.xlane.xlu0 %580
        %582 = vadd.xlane.f32.xlu0 %v567
        %v583 = vpop.xlane.xlu0 %582
        %584 = vadd.xlane.f32.xlu0 %v569
        %v585 = vpop.xlane.xlu0 %584
        %586 = vadd.xlane.f32.xlu0 %v571
        %v587 = vpop.xlane.xlu0 %586
        %588 = vadd.xlane.f32.xlu0 %v573
        %v589 = vpop.xlane.xlu0 %588
        %v590 = vlog2.pop %v575
        %v591 = vmul.f32 %v590, 0.6931472
        %v592 = vlog2.pop %v577
        %v593 = vmul.f32 %v592, 0.6931472
        %v594 = vlog2.pop %v579
        %v595 = vmul.f32 %v594, 0.6931472
        %v596 = vlog2.pop %v581
        %v597 = vmul.f32 %v596, 0.6931472
        %v598 = vlog2.pop %v583
        %v599 = vmul.f32 %v598, 0.6931472
        %v600 = vlog2.pop %v585
        %v601 = vmul.f32 %v600, 0.6931472
        %v602 = vlog2.pop %v587
        %v603 = vmul.f32 %v602, 0.6931472
        %v604 = vlog2.pop %v589
        %v605 = vmul.f32 %v604, 0.6931472
        %v606 = vadd.f32 %v535, %v591
        %v607 = vadd.f32 %v537, %v593
        %v608 = vadd.f32 %v539, %v595
        %v609 = vadd.f32 %v541, %v597
        %v610 = vadd.f32 %v543, %v599
        %v611 = vadd.f32 %v545, %v601
        %v612 = vadd.f32 %v547, %v603
        %v613 = vadd.f32 %v549, %v605
        %v614 = vld [vmem:[%s277] sm:$0xff]
        %v615 = vld [vmem:[%s277 + $0x8] sm:$0xff]
        %v616 = vld [vmem:[%s277 + $0x10] sm:$0xff]
        %v617 = vld [vmem:[%s277 + $0x18] sm:$0xff]
        %v618 = vld [vmem:[%s277 + $0x20] sm:$0xff]
        %v619 = vld [vmem:[%s277 + $0x28] sm:$0xff]
        %v620 = vld [vmem:[%s277 + $0x30] sm:$0xff]
        %v621 = vld [vmem:[%s277 + $0x38] sm:$0xff]
        %622 = vset.pattern.permute.xlu0 0
        %623 = vperm.xlu0 %622, %v614
        %v624 = vpop.permute.xlu0 %623
        %625 = vset.pattern.permute.xlu0 0
        %626 = vperm.xlu0 %625, %v615
        %v627 = vpop.permute.xlu0 %626
        %628 = vset.pattern.permute.xlu0 0
        %629 = vperm.xlu0 %628, %v616
        %v630 = vpop.permute.xlu0 %629
        %631 = vset.pattern.permute.xlu0 0
        %632 = vperm.xlu0 %631, %v617
        %v633 = vpop.permute.xlu0 %632
        %634 = vset.pattern.permute.xlu0 0
        %635 = vperm.xlu0 %634, %v618
        %v636 = vpop.permute.xlu0 %635
        %637 = vset.pattern.permute.xlu0 0
        %638 = vperm.xlu0 %637, %v619
        %v639 = vpop.permute.xlu0 %638
        %640 = vset.pattern.permute.xlu0 0
        %641 = vperm.xlu0 %640, %v620
        %v642 = vpop.permute.xlu0 %641
        %643 = vset.pattern.permute.xlu0 0
        %644 = vperm.xlu0 %643, %v621
        %v645 = vpop.permute.xlu0 %644
        %vm646 = vcmp.eq.s32.totalorder %v524, %v624
        %vm647 = vcmp.eq.s32.totalorder %v524, %v627
        %vm648 = vcmp.eq.s32.totalorder %v524, %v630
        %vm649 = vcmp.eq.s32.totalorder %v524, %v633
        %vm650 = vcmp.eq.s32.totalorder %v524, %v636
        %vm651 = vcmp.eq.s32.totalorder %v524, %v639
        %vm652 = vcmp.eq.s32.totalorder %v524, %v642
        %vm653 = vcmp.eq.s32.totalorder %v524, %v645
        %v654 = vsel %vm646, %v504, 0.0
        %v655 = vsel %vm647, %v506, 0.0
        %v656 = vsel %vm648, %v509, 0.0
        %v657 = vsel %vm649, %v511, 0.0
        %v658 = vsel %vm650, %v514, 0.0
        %v659 = vsel %vm651, %v516, 0.0
        %v660 = vsel %vm652, %v519, 0.0
        %v661 = vsel %vm653, %v521, 0.0
        %662 = vadd.xlane.f32.xlu0 %v654
        %v663 = vpop.xlane.xlu0 %662
        %664 = vadd.xlane.f32.xlu0 %v655
        %v665 = vpop.xlane.xlu0 %664
        %666 = vadd.xlane.f32.xlu0 %v656
        %v667 = vpop.xlane.xlu0 %666
        %668 = vadd.xlane.f32.xlu0 %v657
        %v669 = vpop.xlane.xlu0 %668
        %670 = vadd.xlane.f32.xlu0 %v658
        %v671 = vpop.xlane.xlu0 %670
        %672 = vadd.xlane.f32.xlu0 %v659
        %v673 = vpop.xlane.xlu0 %672
        %674 = vadd.xlane.f32.xlu0 %v660
        %v675 = vpop.xlane.xlu0 %674
        %676 = vadd.xlane.f32.xlu0 %v661
        %v677 = vpop.xlane.xlu0 %676
        %v678 = vsub.f32 %v606, %v663
        %v679 = vsub.f32 %v607, %v665
        %v680 = vsub.f32 %v608, %v667
        %v681 = vsub.f32 %v609, %v669
        %v682 = vsub.f32 %v610, %v671
        %v683 = vsub.f32 %v611, %v673
        %v684 = vsub.f32 %v612, %v675
        %v685 = vsub.f32 %v613, %v677
        %v686 = vld [vmem:[#allocation5] sm:$0x1]
        %v687 = vadd.f32 %v678, %v679
        %v688 = vadd.f32 %v687, %v680
        %v689 = vadd.f32 %v688, %v681
        %v690 = vadd.f32 %v689, %v682
        %v691 = vadd.f32 %v690, %v683
        %v692 = vadd.f32 %v691, %v684
        %v693 = vadd.f32 %v692, %v685
        %v694 = vrot.slane %v693, 4
        %v695 = vadd.f32 %v693, %v694
        %v696 = vrot.slane %v695, 2
        %v697 = vadd.f32 %v695, %v696
        %v698 = vrot.slane %v697, 1
        %v699 = vadd.f32 %v697, %v698
        %v700 = vadd.f32 %v686, %v699
        %vm701 = vcmask 0
        %702 = vst.msk [vmem:[#allocation5] sm:$0x1] %vm701, %v700
        %p703 = scmp.eq.s32.totalorder %s19, 1
        // Predicated region
        $region53: #{tpu_custom_call.1} parent=43 // pred_check
          %p704 = pneg %p703
        $region54: #{tpu_custom_call.1} parent=43 // pred_check_branch
          %706 = sbr.rel (%p704) target = $region56
        $region55: #{tpu_custom_call.1} parent=43 // pred_region
          %v707 = vld [vmem:[#allocation5] sm:$0x1]
          %v708 = vmul.f32 %v707, 0.0078125
          %709 = vst.msk [vmem:[#allocation5] sm:$0x1] %vm701, %v708
        $region56: #{tpu_custom_call.1} parent=43 // pred_fallthru
          _
        // Predicated region
        $region57: #{tpu_custom_call.1} parent=43 // pred_check
          %p710 = pneg %p168
        $region58: #{tpu_custom_call.1} parent=43 // pred_check_branch
          %712 = sbr.rel (%p710) target = $region60
        $region59: #{tpu_custom_call.1} parent=43 // pred_region
          %714 = vsyncadd [#allocation4], 0
          %s716 = sshll.u32 [#allocation5], 4
          %s717 = int_to_ptr.vmem [resolvable:$true] %s716
          %s718 = sshll.u32 %s6, 4
          %s719 = int_to_ptr.hbm [resolvable:$true] %s718
          %721 = dma.vmem_to_hbm [thread:$0]  %s717, 16, %s719, [#allocation4]
        $region60: #{tpu_custom_call.1} parent=43 // pred_fallthru
          _
        // Predicated region
        $region61: #{tpu_custom_call.1} parent=43 // pred_check
          %p722 = pneg %p168
        $region62: #{tpu_custom_call.1} parent=43 // pred_check_branch
          %724 = sbr.rel (%p722) target = $region64
        $region63: #{tpu_custom_call.1} parent=43 // pred_region
          %726 = dma.done [#allocation4], 16
        $region64: #{tpu_custom_call.1} parent=43 // pred_fallthru
          _
      $region44: #{tpu_custom_call.1} parent=5 // pred_fallthru
        _
      %p727 = scmp.le.s32.totalorder 2, %s14
      // Predicated region
      $region65: #{tpu_custom_call.1} parent=5 // pred_check
        %p728 = pneg %p727
      $region66: #{tpu_custom_call.1} parent=5 // pred_check_branch
        %730 = sbr.rel (%p728) target = $region68
      $region67: #{tpu_custom_call.1} parent=5 // pred_region
        %s731 = ssub.s32 %s14, 2
      $region68: #{tpu_custom_call.1} parent=5 // pred_fallthru
        _
    $region6: #{tpu_custom_call.1} parent=1 // loop_footer
      %s18 = sadd.s32 1, %s14
    $region7: #{tpu_custom_call.1} parent=1 // loop_footer_branch
      %13 = sbr.rel target = $region3
    $region8: #{tpu_custom_call.1} parent=1 // loop_exit
      _
    %732 = vsyncpa [#allocation3], 1
    %s733 = scalar_lea.sflag [#allocation3], 1
    %734 = vsyncpa %s733, 1
    %735 = vsyncpa [#allocation4], 1
    %s736 = scalar_lea.sflag [#allocation4], 1
    %737 = vsyncpa %s736, 1

</llo_original>
